<compile_context>
chip_gen: v7x
topology: tpu7x:2x2x1
jax: 0.10.0
libtpu: 0.0.40
codegen_flags: <defaults>
</compile_context>

<pallas_src>
import math
import functools

import jax
import jax.numpy as jnp
from jax.experimental import pallas as pl
from jax.experimental.pallas import tpu as pltpu

# ---------------- problem sizes (small, self-consistent) ----------------
NUM_HEADS = 4
B = NUM_HEADS              # baddbmm only broadcasts if batch == num_heads
L = 128                    # sequence length
C = 128                    # in_channels == out_channels
HEAD_DIM = C // NUM_HEADS
SCALING = HEAD_DIM ** (-0.5)


def _fused_proj_kernel(q_ref, w_ref, bias_ref, o_ref):
    # q_ref:    (TM, C)  f32   rows of the flattened (B*L, C) query
    # w_ref:    (C, C)   bf16  precomputed  scaling * W_in @ W_out
    # bias_ref: (1, C)   f32   precomputed  bias_q @ W_out
    # o_ref:    (TM, C)  f32   lane-dense output tile (C = 128 lanes)
    #
    # Cast the query in-kernel (VPU work hidden under DMA/MXU) instead of a
    # separate host-side bf16 pass over HBM.  Scaling is already folded into
    # the fused weight, so the epilogue is just `acc + bias`.
    q = q_ref[...].astype(jnp.bfloat16)
    acc = jnp.dot(q, w_ref[...], preferred_element_type=jnp.float32)
    o_ref[...] = (acc + bias_ref[...]).astype(o_ref.dtype)


def attn_proj_pallas(query_2d, w_comb_bf16, bias_comb, *, tm):
    """query_2d: (M, C) f32; w_comb_bf16: (C, C) bf16; bias_comb: (1, C) f32."""
    M, Cq = query_2d.shape
    return pl.pallas_call(
        _fused_proj_kernel,
        out_shape=jax.ShapeDtypeStruct((M, Cq), jnp.float32),
        grid=(pl.cdiv(M, tm),),
        in_specs=[
            pl.BlockSpec((tm, Cq), lambda i: (i, 0)),
            pl.BlockSpec((Cq, Cq), lambda i: (0, 0)),
            pl.BlockSpec((1, Cq), lambda i: (0, 0)),
        ],
        out_specs=pl.BlockSpec((tm, Cq), lambda i: (i, 0)),
        compiler_params=pltpu.CompilerParams(
            dimension_semantics=("parallel",),
        ),
        cost_estimate=pl.CostEstimate(
            flops=2 * M * Cq * Cq,
            transcendentals=0,
            bytes_accessed=(M * Cq * 4        # q (f32, cast in-kernel)
                            + Cq * Cq * 2     # fused weight (bf16)
                            + Cq * 4          # fused bias (f32)
                            + M * Cq * 4),    # output (f32)
        ),
    )(query_2d, w_comb_bf16, bias_comb)


def prepare_params(params):
    """One-time (static) algebraic fusion of the two shared-weight matmuls.

    Scaling is folded into the fused weight in f32 BEFORE the bf16 cast so the
    kernel epilogue is a plain add; done once at param-prep, not per call.
    """
    w_in = params["in_proj_weight"]                      # (C, C)
    w_out = params["out_proj_weight"]                    # (C, C)
    bias_q = params["in_proj_bias"][: w_in.shape[0]]     # first C of the 3C bias
    w_comb = SCALING * jnp.dot(w_in, w_out, preferred_element_type=jnp.float32)
    bias_comb = jnp.dot(bias_q.reshape(1, -1), w_out,
                        preferred_element_type=jnp.float32)
    return {
        "w_comb_bf16": w_comb.astype(jnp.bfloat16),      # (C, C) bf16
        "bias_comb": bias_comb,                          # (1, C) f32
    }


@functools.partial(jax.jit, static_argnames=("num_heads",))
def model_forward(query, value, key_padding_mask, prepared, *, num_heads=NUM_HEADS):
    # value / key_padding_mask are unused by the reference forward's live
    # dataflow (value is never read; `key` is an undefined name there).
    del value, key_padding_mask
    Bq, Lq, Cq = query.shape
    M = Bq * Lq
    head_dim = Cq // num_heads
    # Single grid step: the problem is HBM/launch-overhead bound on every
    # generation, so avoiding the extra ~0.35us step beats splitting the tile.
    # TODO(synk): on v7x, a 2-step "parallel" grid may shard across the two
    # TensorCores; only worth it if measured — default to one step.
    tm = M
    b = attn_proj_pallas(query.reshape(M, Cq),
                         prepared["w_comb_bf16"],
                         prepared["bias_comb"],
                         tm=tm)                          # (M, C) f32, lane-dense
    # b.view(batch, num_heads, len, -1).transpose(0, 1) — raw reinterpretation
    # of contiguous (B, L, C) memory; fused inside this jit (single copy).
    b = b.reshape(Bq, num_heads, Lq, head_dim)
    return jnp.transpose(b, (1, 0, 2, 3))                # (H, B, L, head_dim)


def _xavier_uniform(key, shape):
    fan_in, fan_out = shape[1], shape[0]
    bound = math.sqrt(6.0 / (fan_in + fan_out))
    return jax.random.uniform(key, shape, jnp.float32, -bound, bound)


def init_params(key):
    k1, k2 = jax.random.split(key)
    return {
        "in_proj_weight": _xavier_uniform(k1, (C, C)),
        "in_proj_bias": jnp.zeros((3 * C,), jnp.float32),
        "out_proj_weight": _xavier_uniform(k2, (C, C)),
        "out_proj_bias": jnp.zeros((C,), jnp.float32),
    }


def reference_forward(query, params):
    # Pure-JAX reference of the same fused semantics with matching rounding:
    # scaling folded in f32 pre-bf16-cast, query cast to bf16, f32 accumulation.
    w_in = params["in_proj_weight"]
    w_out = params["out_proj_weight"]
    bias_q = params["in_proj_bias"][:C]
    w_comb = (SCALING * jnp.dot(w_in, w_out)).astype(jnp.bfloat16).astype(jnp.float32)
    bias_comb = jnp.dot(bias_q.reshape(1, C), w_out)
    q = query.reshape(-1, C).astype(jnp.bfloat16).astype(jnp.float32)
    b = jnp.dot(q, w_comb) + bias_comb
    b = b.reshape(query.shape[0], NUM_HEADS, query.shape[1], C // NUM_HEADS)
    return jnp.transpose(b, (1, 0, 2, 3))


# TODO(synk): the original forward's `torch.cat`/`.view` of per-head copies of
# the same weight, the discarded `b.view(batch, head_dim, len)`, and the
# undefined `key`/`batch`/`len` symbols have no executable semantics; only the
# live baddbmm -> bmm -> view/transpose dataflow is implemented.

if __name__ == "__main__":
    key = jax.random.PRNGKey(0)
    kq, kv, kp = jax.random.split(key, 3)
    query = jax.random.normal(kq, (B, L, C), jnp.float32)
    value = jax.random.normal(kv, (B, L, C), jnp.float32)
    key_padding_mask = jnp.zeros((B, L), jnp.bool_)

    params = init_params(kp)
    prepared = jax.block_until_ready(prepare_params(params))   # one-time, static

    out = model_forward(query, value, key_padding_mask, prepared)
    out = jax.block_until_ready(out)

    ref = reference_forward(query, params)
    assert out.shape == (NUM_HEADS, B, L, HEAD_DIM), out.shape
    assert jnp.allclose(out, ref, atol=2e-3, rtol=2e-3), "mismatch vs JAX reference"
    print("KERNEL_OK")
</pallas_src>

<mosaic_0001>
module attributes {stable_mosaic.version = 11 : i64} {
  func.func @_fused_proj_kernel(%arg0: i32, %arg1: memref<512x128xf32, #tpu.memory_space<vmem>>, %arg2: memref<128x128xbf16, #tpu.memory_space<vmem>>, %arg3: memref<1x128xf32, #tpu.memory_space<vmem>>, %arg4: memref<512x128xf32, #tpu.memory_space<vmem>>) attributes {dimension_semantics = [#tpu.dimension_semantics<parallel>], iteration_bounds = array<i64: 1>, scalar_prefetch = 0 : i64, scratch_operands = 0 : i64, tpu.core_type = #tpu.core_type<tc>, window_params = [{transform_indices = @transform_0, window_bounds = array<i64: 512, 128>}, {pipeline_mode = #tpu.pipeline_mode<synchronous>, transform_indices = @transform_1, window_bounds = array<i64: 128, 128>}, {pipeline_mode = #tpu.pipeline_mode<synchronous>, transform_indices = @transform_2, window_bounds = array<i64: 1, 128>}, {transform_indices = @transform_3, window_bounds = array<i64: 512, 128>}]} {
    %c0 = arith.constant 0 : index
    %c0_0 = arith.constant 0 : index
    %0 = vector.load %arg1[%c0, %c0_0] : memref<512x128xf32, #tpu.memory_space<vmem>>, vector<512x128xf32>
    %1 = arith.truncf %0 : vector<512x128xf32> to vector<512x128xbf16>
    %c0_1 = arith.constant 0 : index
    %c0_2 = arith.constant 0 : index
    %2 = vector.load %arg2[%c0_1, %c0_2] : memref<128x128xbf16, #tpu.memory_space<vmem>>, vector<128x128xbf16>
    %cst = arith.constant dense<0.000000e+00> : vector<512x128xf32>
    %3 = tpu.matmul %1, %2, %cst {dimension_numbers = #tpu.dot_dimension_numbers<[1], [0], [0], [1], [0, 0, 1, 1], [], []>} : vector<512x128xbf16>, vector<128x128xbf16>, vector<512x128xf32> -> vector<512x128xf32>
    %c0_3 = arith.constant 0 : index
    %c0_4 = arith.constant 0 : index
    %4 = vector.load %arg3[%c0_3, %c0_4] : memref<1x128xf32, #tpu.memory_space<vmem>>, vector<1x128xf32>
    %5 = vector.broadcast %4 : vector<1x128xf32> to vector<512x128xf32>
    %6 = arith.addf %3, %5 : vector<512x128xf32>
    %c0_5 = arith.constant 0 : index
    %c0_6 = arith.constant 0 : index
    %7 = vector.load %arg4[%c0_5, %c0_6] : memref<512x128xf32, #tpu.memory_space<vmem>>, vector<512x128xf32>
    tpu.vector_store %arg4[%c0_5, %c0_6], %6 {strides = array<i32>} : memref<512x128xf32, #tpu.memory_space<vmem>>, vector<512x128xf32>,
    return
  }
  func.func @transform_0(%arg0: i32) -> (i32, i32) {
    %c0_i32 = arith.constant 0 : i32
    %c0_i32_0 = arith.constant 0 : i32
    return %arg0, %c0_i32 : i32, i32
  }
  func.func @transform_1(%arg0: i32) -> (i32, i32) {
    %c0_i32 = arith.constant 0 : i32
    %c0_i32_0 = arith.constant 0 : i32
    %c0_i32_1 = arith.constant 0 : i32
    return %c0_i32, %c0_i32_0 : i32, i32
  }
  func.func @transform_2(%arg0: i32) -> (i32, i32) {
    %c0_i32 = arith.constant 0 : i32
    %c0_i32_0 = arith.constant 0 : i32
    %c0_i32_1 = arith.constant 0 : i32
    return %c0_i32, %c0_i32_0 : i32, i32
  }
  func.func @transform_3(%arg0: i32) -> (i32, i32) {
    %c0_i32 = arith.constant 0 : i32
    %c0_i32_0 = arith.constant 0 : i32
    return %arg0, %c0_i32 : i32, i32
  }
}

</mosaic_0001>

<llo_original>
// kernel: model_forward.1
$region0: #{model_forward.1}
  #allocation0 [shape = 'u32[]', space=smem, size = 0x4, offset = 0x4, fixed_abs, tag = 'smem constant byte address 0x4 - core index']
  #allocation1 [shape = 'u32[144,128]{1,0:T(1,128)}', space=vmem, size = 0x12000, scoped, tag = 'internal scratch']
  %s0 = inlined_call_operand.hbm [shape: f32[512,128], index: 0, kind: input, shape index: {}]
  %s1 = inlined_call_operand.hbm [shape: bf16[128,128], index: 1, kind: input, shape index: {}]
  %s2 = inlined_call_operand.vmem [shape: f32[1,128], index: 2, kind: input, shape index: {}]
  %s3 = inlined_call_operand.vmem [shape: f32[512,128], index: 3, kind: output, shape index: {}]
  %s4 = sld [smem:[#allocation0]]
  $region30: #{model_forward.1} parent=0
    _
  %s6 = ssub.s32 1, %s4
  %s7 = scalar_select 0, %s6, %s4
  $region1: #{model_forward.1} parent=0
    #allocation2 [shape = 'u8[262144]{0}', space=vmem, size = 0x40000, scoped, tag = 'input window, operand 0, single buffered']
    #allocation3 [shape = 's32[1]{0}', space=sflag, size = 0x4, scoped, tag = 'scoped memory for model_forward.1']
    #allocation4 [shape = 'u8[32768]{0}', space=vmem, size = 0x8000, scoped, tag = 'input window, operand 1, single buffered']
    #allocation5 [shape = 's32[1]{0}', space=sflag, size = 0x4, scoped, tag = 'scoped memory for model_forward.1']
    %8 = vsyncpa [#allocation3], 0
    %9 = vsyncpa [#allocation5], 0
    // Predicated region
    $region2: #{model_forward.1} parent=1 // pred_check
      _
    $region3: #{model_forward.1} parent=1 // pred_check_branch
      %11 = sbr.rel (0) target = $region5
    $region4: #{model_forward.1} parent=1 // pred_region
      %s13 = ssub.s32 8192, 8192
      %14 = vsyncadd [#allocation3], %s13
      %s15 = sshll.u32 [#allocation2], 4
      %s16 = int_to_ptr.vmem [resolvable:$true] %s15
      %21 = dma.hbm_to_vmem [thread:$0]  %s0, 8192, %s16, [#allocation3], 128, 128, 8
    $region5: #{model_forward.1} parent=1 // pred_fallthru
      _
    // Predicated region
    $region6: #{model_forward.1} parent=1 // pred_check
      _
    $region7: #{model_forward.1} parent=1 // pred_check_branch
      %23 = sbr.rel (0) target = $region9
    $region8: #{model_forward.1} parent=1 // pred_region
      %s25 = ssub.s32 1024, 1024
      %26 = vsyncadd [#allocation5], %s25
      %s27 = sshll.u32 [#allocation4], 4
      %s28 = int_to_ptr.vmem [resolvable:$true] %s27
      %33 = dma.hbm_to_vmem [thread:$0]  %s1, 1024, %s28, [#allocation5], 64, 64, 4
    $region9: #{model_forward.1} parent=1 // pred_fallthru
      _
    // Predicated region
    $region10: #{model_forward.1} parent=1 // pred_check
      _
    $region11: #{model_forward.1} parent=1 // pred_check_branch
      %35 = sbr.rel (0) target = $region13
    $region12: #{model_forward.1} parent=1 // pred_region
      _
    $region13: #{model_forward.1} parent=1 // pred_fallthru
      _
    // Predicated region
    $region14: #{model_forward.1} parent=1 // pred_check
      _
    $region15: #{model_forward.1} parent=1 // pred_check_branch
      %37 = sbr.rel (0) target = $region17
    $region16: #{model_forward.1} parent=1 // pred_region
      %38 = dma.done [#allocation3], 8192
    $region17: #{model_forward.1} parent=1 // pred_fallthru
      _
    // Predicated region
    $region18: #{model_forward.1} parent=1 // pred_check
      _
    $region19: #{model_forward.1} parent=1 // pred_check_branch
      %40 = sbr.rel (0) target = $region21
    $region20: #{model_forward.1} parent=1 // pred_region
      %41 = dma.done [#allocation5], 1024
    $region21: #{model_forward.1} parent=1 // pred_fallthru
      _
    %v43 = vld [vmem:[#allocation2] sm:$0xff]
    %v44 = vld [vmem:[#allocation2 + $0x8] sm:$0xff]
    %v45 = vld [vmem:[#allocation2 + $0x10] sm:$0xff]
    %v46 = vld [vmem:[#allocation2 + $0x18] sm:$0xff]
    %v47 = vld [vmem:[#allocation2 + $0x20] sm:$0xff]
    %v48 = vld [vmem:[#allocation2 + $0x28] sm:$0xff]
    %v49 = vld [vmem:[#allocation2 + $0x30] sm:$0xff]
    %v50 = vld [vmem:[#allocation2 + $0x38] sm:$0xff]
    %v51 = vld [vmem:[#allocation2 + $0x40] sm:$0xff]
    %v52 = vld [vmem:[#allocation2 + $0x48] sm:$0xff]
    %v53 = vld [vmem:[#allocation2 + $0x50] sm:$0xff]
    %v54 = vld [vmem:[#allocation2 + $0x58] sm:$0xff]
    %v55 = vld [vmem:[#allocation2 + $0x60] sm:$0xff]
    %v56 = vld [vmem:[#allocation2 + $0x68] sm:$0xff]
    %v57 = vld [vmem:[#allocation2 + $0x70] sm:$0xff]
    %v58 = vld [vmem:[#allocation2 + $0x78] sm:$0xff]
    %v59 = vld [vmem:[#allocation2 + $0x80] sm:$0xff]
    %v60 = vld [vmem:[#allocation2 + $0x88] sm:$0xff]
    %v61 = vld [vmem:[#allocation2 + $0x90] sm:$0xff]
    %v62 = vld [vmem:[#allocation2 + $0x98] sm:$0xff]
    %v63 = vld [vmem:[#allocation2 + $0xa0] sm:$0xff]
    %v64 = vld [vmem:[#allocation2 + $0xa8] sm:$0xff]
    %v65 = vld [vmem:[#allocation2 + $0xb0] sm:$0xff]
    %v66 = vld [vmem:[#allocation2 + $0xb8] sm:$0xff]
    %v67 = vld [vmem:[#allocation2 + $0xc0] sm:$0xff]
    %v68 = vld [vmem:[#allocation2 + $0xc8] sm:$0xff]
    %v69 = vld [vmem:[#allocation2 + $0xd0] sm:$0xff]
    %v70 = vld [vmem:[#allocation2 + $0xd8] sm:$0xff]
    %v71 = vld [vmem:[#allocation2 + $0xe0] sm:$0xff]
    %v72 = vld [vmem:[#allocation2 + $0xe8] sm:$0xff]
    %v73 = vld [vmem:[#allocation2 + $0xf0] sm:$0xff]
    %v74 = vld [vmem:[#allocation2 + $0xf8] sm:$0xff]
    %v75 = vld [vmem:[#allocation2 + $0x100] sm:$0xff]
    %v76 = vld [vmem:[#allocation2 + $0x108] sm:$0xff]
    %v77 = vld [vmem:[#allocation2 + $0x110] sm:$0xff]
    %v78 = vld [vmem:[#allocation2 + $0x118] sm:$0xff]
    %v79 = vld [vmem:[#allocation2 + $0x120] sm:$0xff]
    %v80 = vld [vmem:[#allocation2 + $0x128] sm:$0xff]
    %v81 = vld [vmem:[#allocation2 + $0x130] sm:$0xff]
    %v82 = vld [vmem:[#allocation2 + $0x138] sm:$0xff]
    %v83 = vld [vmem:[#allocation2 + $0x140] sm:$0xff]
    %v84 = vld [vmem:[#allocation2 + $0x148] sm:$0xff]
    %v85 = vld [vmem:[#allocation2 + $0x150] sm:$0xff]
    %v86 = vld [vmem:[#allocation2 + $0x158] sm:$0xff]
    %v87 = vld [vmem:[#allocation2 + $0x160] sm:$0xff]
    %v88 = vld [vmem:[#allocation2 + $0x168] sm:$0xff]
    %v89 = vld [vmem:[#allocation2 + $0x170] sm:$0xff]
    %v90 = vld [vmem:[#allocation2 + $0x178] sm:$0xff]
    %v91 = vld [vmem:[#allocation2 + $0x180] sm:$0xff]
    %v92 = vld [vmem:[#allocation2 + $0x188] sm:$0xff]
    %v93 = vld [vmem:[#allocation2 + $0x190] sm:$0xff]
    %v94 = vld [vmem:[#allocation2 + $0x198] sm:$0xff]
    %v95 = vld [vmem:[#allocation2 + $0x1a0] sm:$0xff]
    %v96 = vld [vmem:[#allocation2 + $0x1a8] sm:$0xff]
    %v97 = vld [vmem:[#allocation2 + $0x1b0] sm:$0xff]
    %v98 = vld [vmem:[#allocation2 + $0x1b8] sm:$0xff]
    %v99 = vld [vmem:[#allocation2 + $0x1c0] sm:$0xff]
    %v100 = vld [vmem:[#allocation2 + $0x1c8] sm:$0xff]
    %v101 = vld [vmem:[#allocation2 + $0x1d0] sm:$0xff]
    %v102 = vld [vmem:[#allocation2 + $0x1d8] sm:$0xff]
    %v103 = vld [vmem:[#allocation2 + $0x1e0] sm:$0xff]
    %v104 = vld [vmem:[#allocation2 + $0x1e8] sm:$0xff]
    %v105 = vld [vmem:[#allocation2 + $0x1f0] sm:$0xff]
    %v106 = vld [vmem:[#allocation2 + $0x1f8] sm:$0xff]
    %v107 = vpack.c.bf16 %v44, %v43
    %v108 = vpack.c.bf16 %v46, %v45
    %v109 = vpack.c.bf16 %v48, %v47
    %v110 = vpack.c.bf16 %v50, %v49
    %v111 = vpack.c.bf16 %v52, %v51
    %v112 = vpack.c.bf16 %v54, %v53
    %v113 = vpack.c.bf16 %v56, %v55
    %v114 = vpack.c.bf16 %v58, %v57
    %v115 = vpack.c.bf16 %v60, %v59
    %v116 = vpack.c.bf16 %v62, %v61
    %v117 = vpack.c.bf16 %v64, %v63
    %v118 = vpack.c.bf16 %v66, %v65
    %v119 = vpack.c.bf16 %v68, %v67
    %v120 = vpack.c.bf16 %v70, %v69
    %v121 = vpack.c.bf16 %v72, %v71
    %v122 = vpack.c.bf16 %v74, %v73
    %v123 = vpack.c.bf16 %v76, %v75
    %v124 = vpack.c.bf16 %v78, %v77
    %v125 = vpack.c.bf16 %v80, %v79
    %v126 = vpack.c.bf16 %v82, %v81
    %v127 = vpack.c.bf16 %v84, %v83
    %v128 = vpack.c.bf16 %v86, %v85
    %v129 = vpack.c.bf16 %v88, %v87
    %v130 = vpack.c.bf16 %v90, %v89
    %v131 = vpack.c.bf16 %v92, %v91
    %v132 = vpack.c.bf16 %v94, %v93
    %v133 = vpack.c.bf16 %v96, %v95
    %v134 = vpack.c.bf16 %v98, %v97
    %v135 = vpack.c.bf16 %v100, %v99
    %v136 = vpack.c.bf16 %v102, %v101
    %v137 = vpack.c.bf16 %v104, %v103
    %v138 = vpack.c.bf16 %v106, %v105
    %v139 = vld [vmem:[#allocation4] sm:$0xf]
    %v140 = vld [vmem:[#allocation4 + $0x4] sm:$0xf]
    %v141 = vld [vmem:[#allocation4 + $0x8] sm:$0xf]
    %v142 = vld [vmem:[#allocation4 + $0xc] sm:$0xf]
    %v143 = vld [vmem:[#allocation4 + $0x10] sm:$0xf]
    %v144 = vld [vmem:[#allocation4 + $0x14] sm:$0xf]
    %v145 = vld [vmem:[#allocation4 + $0x18] sm:$0xf]
    %v146 = vld [vmem:[#allocation4 + $0x1c] sm:$0xf]
    %v147 = vld [vmem:[#allocation4 + $0x20] sm:$0xf]
    %v148 = vld [vmem:[#allocation4 + $0x24] sm:$0xf]
    %v149 = vld [vmem:[#allocation4 + $0x28] sm:$0xf]
    %v150 = vld [vmem:[#allocation4 + $0x2c] sm:$0xf]
    %v151 = vld [vmem:[#allocation4 + $0x30] sm:$0xf]
    %v152 = vld [vmem:[#allocation4 + $0x34] sm:$0xf]
    %v153 = vld [vmem:[#allocation4 + $0x38] sm:$0xf]
    %v154 = vld [vmem:[#allocation4 + $0x3c] sm:$0xf]
    %v155 = vld [vmem:[%s2] sm:$0x1]
    %v157 = vlaneseq
    %v158 = vshrl.u32 %v157, 7
    %v159 = vsub.s32 0, %v158
    %v160 = vrot.slane %v155, %v159
    %v178 = vunpack.c.l.b16 %v139
    %v179 = vunpack.c.l.b16 %v140
    %v180 = vunpack.c.l.b16 %v141
    %v181 = vunpack.c.l.b16 %v142
    %v182 = vunpack.c.l.b16 %v143
    %v183 = vunpack.c.l.b16 %v144
    %v184 = vunpack.c.l.b16 %v145
    %v185 = vunpack.c.l.b16 %v146
    %v186 = vunpack.c.l.b16 %v147
    %v187 = vunpack.c.l.b16 %v148
    %v188 = vunpack.c.l.b16 %v149
    %v189 = vunpack.c.l.b16 %v150
    %v190 = vunpack.c.l.b16 %v151
    %v191 = vunpack.c.l.b16 %v152
    %v192 = vunpack.c.l.b16 %v153
    %v193 = vunpack.c.l.b16 %v154
    %v194 = vpack.c.b16 %v179, %v178
    %v195 = vpack.c.b16 %v181, %v180
    %v196 = vpack.c.b16 %v183, %v182
    %v197 = vpack.c.b16 %v185, %v184
    %v198 = vpack.c.b16 %v187, %v186
    %v199 = vpack.c.b16 %v189, %v188
    %v200 = vpack.c.b16 %v191, %v190
    %v201 = vpack.c.b16 %v193, %v192
    %210 = vmatprep.subr.bf16.mxu0 0
    %211 = vmatpush1.bf16.msra.mxu0 %v194
    %212 = vmatprep.subr.bf16.mxu0 0
    %213 = vmatpush1.bf16.msra.mxu0 %v195
    %214 = vmatprep.subr.bf16.mxu0 0
    %215 = vmatpush1.bf16.msra.mxu0 %v196
    %216 = vmatprep.subr.bf16.mxu0 0
    %217 = vmatpush1.bf16.msra.mxu0 %v197
    %218 = vmatprep.subr.bf16.mxu0 0
    %219 = vmatpush1.bf16.msra.mxu0 %v198
    %220 = vmatprep.subr.bf16.mxu0 0
    %221 = vmatpush1.bf16.msra.mxu0 %v199
    %222 = vmatprep.subr.bf16.mxu0 0
    %223 = vmatpush1.bf16.msra.mxu0 %v200
    %224 = vmatprep.subr.bf16.mxu0 0
    %225 = vmatpush1.bf16.msra.mxu0 %v201
    %226 = vmatprep.subr.bf16.mxu0 0
    %227 = vmatpush1.bf16.msra.mxu0 0
    %228 = vmatprep.subr.bf16.mxu0 0
    %229 = vmatpush1.bf16.msra.mxu0 0
    %230 = vmatprep.subr.bf16.mxu0 0
    %231 = vmatpush1.bf16.msra.mxu0 0
    %232 = vmatprep.subr.bf16.mxu0 0
    %233 = vmatpush1.bf16.msra.mxu0 0
    %234 = vmatprep.subr.bf16.mxu0 0
    %235 = vmatpush1.bf16.msra.mxu0 0
    %236 = vmatprep.subr.bf16.mxu0 0
    %237 = vmatpush1.bf16.msra.mxu0 0
    %238 = vmatprep.subr.bf16.mxu0 0
    %239 = vmatpush1.bf16.msra.mxu0 0
    %240 = vmatprep.subr.bf16.mxu0 0
    %241 = vmatpush1.bf16.msra.mxu0 0
    %242 = vmatprep.mubr.bf16.mxu0 0
    %243 = vmatmul.mubr.bf16.gmra.mrb[0].mxu0 %v107
    %v244 = vpop.f32.mrb[0].mxu0
    %v245 = vadd.f32 %v160, %v244
    %v246 = vpop.f32.mrb[0].mxu0
    %v247 = vpop.f32.mrb[0].mxu0
    %v248 = vadd.f32 %v160, %v247
    %v249 = vpop.f32.mrb[0].mxu0
    %250 = vmatprep.mubr.bf16.mxu0 0
    %251 = vmatmul.mubr.bf16.gmra.mrb[0].mxu0 %v108
    %v252 = vpop.f32.mrb[0].mxu0
    %v253 = vadd.f32 %v160, %v252
    %v254 = vpop.f32.mrb[0].mxu0
    %v255 = vpop.f32.mrb[0].mxu0
    %v256 = vadd.f32 %v160, %v255
    %v257 = vpop.f32.mrb[0].mxu0
    %258 = vmatprep.mubr.bf16.mxu0 0
    %259 = vmatmul.mubr.bf16.gmra.mrb[0].mxu0 %v109
    %v260 = vpop.f32.mrb[0].mxu0
    %v261 = vadd.f32 %v160, %v260
    %v262 = vpop.f32.mrb[0].mxu0
    %v263 = vpop.f32.mrb[0].mxu0
    %v264 = vadd.f32 %v160, %v263
    %v265 = vpop.f32.mrb[0].mxu0
    %266 = vmatprep.mubr.bf16.mxu0 0
    %267 = vmatmul.mubr.bf16.gmra.mrb[0].mxu0 %v110
    %v268 = vpop.f32.mrb[0].mxu0
    %v269 = vadd.f32 %v160, %v268
    %v270 = vpop.f32.mrb[0].mxu0
    %v271 = vpop.f32.mrb[0].mxu0
    %v272 = vadd.f32 %v160, %v271
    %v273 = vpop.f32.mrb[0].mxu0
    %274 = vmatprep.mubr.bf16.mxu0 0
    %275 = vmatmul.mubr.bf16.gmra.mrb[0].mxu0 %v111
    %v276 = vpop.f32.mrb[0].mxu0
    %v277 = vadd.f32 %v160, %v276
    %v278 = vpop.f32.mrb[0].mxu0
    %v279 = vpop.f32.mrb[0].mxu0
    %v280 = vadd.f32 %v160, %v279
    %v281 = vpop.f32.mrb[0].mxu0
    %282 = vmatprep.mubr.bf16.mxu0 0
    %283 = vmatmul.mubr.bf16.gmra.mrb[0].mxu0 %v112
    %v284 = vpop.f32.mrb[0].mxu0
    %v285 = vadd.f32 %v160, %v284
    %v286 = vpop.f32.mrb[0].mxu0
    %v287 = vpop.f32.mrb[0].mxu0
    %v288 = vadd.f32 %v160, %v287
    %v289 = vpop.f32.mrb[0].mxu0
    %290 = vmatprep.mubr.bf16.mxu0 0
    %291 = vmatmul.mubr.bf16.gmra.mrb[0].mxu0 %v113
    %v292 = vpop.f32.mrb[0].mxu0
    %v293 = vadd.f32 %v160, %v292
    %v294 = vpop.f32.mrb[0].mxu0
    %v295 = vpop.f32.mrb[0].mxu0
    %v296 = vadd.f32 %v160, %v295
    %v297 = vpop.f32.mrb[0].mxu0
    %298 = vmatprep.mubr.bf16.mxu0 0
    %299 = vmatmul.mubr.bf16.gmra.mrb[0].mxu0 %v114
    %v300 = vpop.f32.mrb[0].mxu0
    %v301 = vadd.f32 %v160, %v300
    %v302 = vpop.f32.mrb[0].mxu0
    %v303 = vpop.f32.mrb[0].mxu0
    %v304 = vadd.f32 %v160, %v303
    %v305 = vpop.f32.mrb[0].mxu0
    %306 = vmatprep.mubr.bf16.mxu0 0
    %307 = vmatmul.mubr.bf16.gmra.mrb[0].mxu0 %v115
    %v308 = vpop.f32.mrb[0].mxu0
    %v309 = vadd.f32 %v160, %v308
    %v310 = vpop.f32.mrb[0].mxu0
    %v311 = vpop.f32.mrb[0].mxu0
    %v312 = vadd.f32 %v160, %v311
    %v313 = vpop.f32.mrb[0].mxu0
    %314 = vmatprep.mubr.bf16.mxu0 0
    %315 = vmatmul.mubr.bf16.gmra.mrb[0].mxu0 %v116
    %v316 = vpop.f32.mrb[0].mxu0
    %v317 = vadd.f32 %v160, %v316
    %v318 = vpop.f32.mrb[0].mxu0
    %v319 = vpop.f32.mrb[0].mxu0
    %v320 = vadd.f32 %v160, %v319
    %v321 = vpop.f32.mrb[0].mxu0
    %322 = vmatprep.mubr.bf16.mxu0 0
    %323 = vmatmul.mubr.bf16.gmra.mrb[0].mxu0 %v117
    %v324 = vpop.f32.mrb[0].mxu0
    %v325 = vadd.f32 %v160, %v324
    %v326 = vpop.f32.mrb[0].mxu0
    %v327 = vpop.f32.mrb[0].mxu0
    %v328 = vadd.f32 %v160, %v327
    %v329 = vpop.f32.mrb[0].mxu0
    %330 = vmatprep.mubr.bf16.mxu0 0
    %331 = vmatmul.mubr.bf16.gmra.mrb[0].mxu0 %v118
    %v332 = vpop.f32.mrb[0].mxu0
    %v333 = vadd.f32 %v160, %v332
    %v334 = vpop.f32.mrb[0].mxu0
    %v335 = vpop.f32.mrb[0].mxu0
    %v336 = vadd.f32 %v160, %v335
    %v337 = vpop.f32.mrb[0].mxu0
    %338 = vmatprep.mubr.bf16.mxu0 0
    %339 = vmatmul.mubr.bf16.gmra.mrb[0].mxu0 %v119
    %v340 = vpop.f32.mrb[0].mxu0
    %v341 = vadd.f32 %v160, %v340
    %v342 = vpop.f32.mrb[0].mxu0
    %v343 = vpop.f32.mrb[0].mxu0
    %v344 = vadd.f32 %v160, %v343
    %v345 = vpop.f32.mrb[0].mxu0
    %346 = vmatprep.mubr.bf16.mxu0 0
    %347 = vmatmul.mubr.bf16.gmra.mrb[0].mxu0 %v120
    %v348 = vpop.f32.mrb[0].mxu0
    %v349 = vadd.f32 %v160, %v348
    %v350 = vpop.f32.mrb[0].mxu0
    %v351 = vpop.f32.mrb[0].mxu0
    %v352 = vadd.f32 %v160, %v351
    %v353 = vpop.f32.mrb[0].mxu0
    %354 = vmatprep.mubr.bf16.mxu0 0
    %355 = vmatmul.mubr.bf16.gmra.mrb[0].mxu0 %v121
    %v356 = vpop.f32.mrb[0].mxu0
    %v357 = vadd.f32 %v160, %v356
    %v358 = vpop.f32.mrb[0].mxu0
    %v359 = vpop.f32.mrb[0].mxu0
    %v360 = vadd.f32 %v160, %v359
    %v361 = vpop.f32.mrb[0].mxu0
    %362 = vmatprep.mubr.bf16.mxu0 0
    %363 = vmatmul.mubr.bf16.gmra.mrb[0].mxu0 %v122
    %v364 = vpop.f32.mrb[0].mxu0
    %v365 = vadd.f32 %v160, %v364
    %v366 = vpop.f32.mrb[0].mxu0
    %v367 = vpop.f32.mrb[0].mxu0
    %v368 = vadd.f32 %v160, %v367
    %v369 = vpop.f32.mrb[0].mxu0
    %370 = vmatprep.mubr.bf16.mxu0 0
    %371 = vmatmul.mubr.bf16.gmra.mrb[0].mxu0 %v123
    %v372 = vpop.f32.mrb[0].mxu0
    %v373 = vadd.f32 %v160, %v372
    %v374 = vpop.f32.mrb[0].mxu0
    %v375 = vpop.f32.mrb[0].mxu0
    %v376 = vadd.f32 %v160, %v375
    %v377 = vpop.f32.mrb[0].mxu0
    %378 = vmatprep.mubr.bf16.mxu0 0
    %379 = vmatmul.mubr.bf16.gmra.mrb[0].mxu0 %v124
    %v380 = vpop.f32.mrb[0].mxu0
    %v381 = vadd.f32 %v160, %v380
    %v382 = vpop.f32.mrb[0].mxu0
    %v383 = vpop.f32.mrb[0].mxu0
    %v384 = vadd.f32 %v160, %v383
    %v385 = vpop.f32.mrb[0].mxu0
    %386 = vmatprep.mubr.bf16.mxu0 0
    %387 = vmatmul.mubr.bf16.gmra.mrb[0].mxu0 %v125
    %v388 = vpop.f32.mrb[0].mxu0
    %v389 = vadd.f32 %v160, %v388
    %v390 = vpop.f32.mrb[0].mxu0
    %v391 = vpop.f32.mrb[0].mxu0
    %v392 = vadd.f32 %v160, %v391
    %v393 = vpop.f32.mrb[0].mxu0
    %394 = vmatprep.mubr.bf16.mxu0 0
    %395 = vmatmul.mubr.bf16.gmra.mrb[0].mxu0 %v126
    %v396 = vpop.f32.mrb[0].mxu0
    %v397 = vadd.f32 %v160, %v396
    %v398 = vpop.f32.mrb[0].mxu0
    %v399 = vpop.f32.mrb[0].mxu0
    %v400 = vadd.f32 %v160, %v399
    %v401 = vpop.f32.mrb[0].mxu0
    %402 = vmatprep.mubr.bf16.mxu0 0
    %403 = vmatmul.mubr.bf16.gmra.mrb[0].mxu0 %v127
    %v404 = vpop.f32.mrb[0].mxu0
    %v405 = vadd.f32 %v160, %v404
    %v406 = vpop.f32.mrb[0].mxu0
    %v407 = vpop.f32.mrb[0].mxu0
    %v408 = vadd.f32 %v160, %v407
    %v409 = vpop.f32.mrb[0].mxu0
    %410 = vmatprep.mubr.bf16.mxu0 0
    %411 = vmatmul.mubr.bf16.gmra.mrb[0].mxu0 %v128
    %v412 = vpop.f32.mrb[0].mxu0
    %v413 = vadd.f32 %v160, %v412
    %v414 = vpop.f32.mrb[0].mxu0
    %v415 = vpop.f32.mrb[0].mxu0
    %v416 = vadd.f32 %v160, %v415
    %v417 = vpop.f32.mrb[0].mxu0
    %418 = vmatprep.mubr.bf16.mxu0 0
    %419 = vmatmul.mubr.bf16.gmra.mrb[0].mxu0 %v129
    %v420 = vpop.f32.mrb[0].mxu0
    %v421 = vadd.f32 %v160, %v420
    %v422 = vpop.f32.mrb[0].mxu0
    %v423 = vpop.f32.mrb[0].mxu0
    %v424 = vadd.f32 %v160, %v423
    %v425 = vpop.f32.mrb[0].mxu0
    %426 = vmatprep.mubr.bf16.mxu0 0
    %427 = vmatmul.mubr.bf16.gmra.mrb[0].mxu0 %v130
    %v428 = vpop.f32.mrb[0].mxu0
    %v429 = vadd.f32 %v160, %v428
    %v430 = vpop.f32.mrb[0].mxu0
    %v431 = vpop.f32.mrb[0].mxu0
    %v432 = vadd.f32 %v160, %v431
    %v433 = vpop.f32.mrb[0].mxu0
    %434 = vmatprep.mubr.bf16.mxu0 0
    %435 = vmatmul.mubr.bf16.gmra.mrb[0].mxu0 %v131
    %v436 = vpop.f32.mrb[0].mxu0
    %v437 = vadd.f32 %v160, %v436
    %v438 = vpop.f32.mrb[0].mxu0
    %v439 = vpop.f32.mrb[0].mxu0
    %v440 = vadd.f32 %v160, %v439
    %v441 = vpop.f32.mrb[0].mxu0
    %442 = vmatprep.mubr.bf16.mxu0 0
    %443 = vmatmul.mubr.bf16.gmra.mrb[0].mxu0 %v132
    %v444 = vpop.f32.mrb[0].mxu0
    %v445 = vadd.f32 %v160, %v444
    %v446 = vpop.f32.mrb[0].mxu0
    %v447 = vpop.f32.mrb[0].mxu0
    %v448 = vadd.f32 %v160, %v447
    %v449 = vpop.f32.mrb[0].mxu0
    %450 = vmatprep.mubr.bf16.mxu0 0
    %451 = vmatmul.mubr.bf16.gmra.mrb[0].mxu0 %v133
    %v452 = vpop.f32.mrb[0].mxu0
    %v453 = vadd.f32 %v160, %v452
    %v454 = vpop.f32.mrb[0].mxu0
    %v455 = vpop.f32.mrb[0].mxu0
    %v456 = vadd.f32 %v160, %v455
    %v457 = vpop.f32.mrb[0].mxu0
    %458 = vmatprep.mubr.bf16.mxu0 0
    %459 = vmatmul.mubr.bf16.gmra.mrb[0].mxu0 %v134
    %v460 = vpop.f32.mrb[0].mxu0
    %v461 = vadd.f32 %v160, %v460
    %v462 = vpop.f32.mrb[0].mxu0
    %v463 = vpop.f32.mrb[0].mxu0
    %v464 = vadd.f32 %v160, %v463
    %v465 = vpop.f32.mrb[0].mxu0
    %466 = vmatprep.mubr.bf16.mxu0 0
    %467 = vmatmul.mubr.bf16.gmra.mrb[0].mxu0 %v135
    %v468 = vpop.f32.mrb[0].mxu0
    %v469 = vadd.f32 %v160, %v468
    %v470 = vpop.f32.mrb[0].mxu0
    %v471 = vpop.f32.mrb[0].mxu0
    %v472 = vadd.f32 %v160, %v471
    %v473 = vpop.f32.mrb[0].mxu0
    %474 = vmatprep.mubr.bf16.mxu0 0
    %475 = vmatmul.mubr.bf16.gmra.mrb[0].mxu0 %v136
    %v476 = vpop.f32.mrb[0].mxu0
    %v477 = vadd.f32 %v160, %v476
    %v478 = vpop.f32.mrb[0].mxu0
    %v479 = vpop.f32.mrb[0].mxu0
    %v480 = vadd.f32 %v160, %v479
    %v481 = vpop.f32.mrb[0].mxu0
    %482 = vmatprep.mubr.bf16.mxu0 0
    %483 = vmatmul.mubr.bf16.gmra.mrb[0].mxu0 %v137
    %v484 = vpop.f32.mrb[0].mxu0
    %v485 = vadd.f32 %v160, %v484
    %v486 = vpop.f32.mrb[0].mxu0
    %v487 = vpop.f32.mrb[0].mxu0
    %v488 = vadd.f32 %v160, %v487
    %v489 = vpop.f32.mrb[0].mxu0
    %490 = vmatprep.mubr.bf16.mxu0 0
    %491 = vmatmul.mubr.bf16.gmra.mrb[0].mxu0 %v138
    %v492 = vpop.f32.mrb[0].mxu0
    %v493 = vadd.f32 %v160, %v492
    %v494 = vpop.f32.mrb[0].mxu0
    %v495 = vpop.f32.mrb[0].mxu0
    %v496 = vadd.f32 %v160, %v495
    %v497 = vpop.f32.mrb[0].mxu0
    %498 = vdwg.mxu0
    %499 = vst [vmem:[%s3] sm:$0xff] %v245
    %500 = vst [vmem:[%s3 + $0x8] sm:$0xff] %v248
    %501 = vst [vmem:[%s3 + $0x10] sm:$0xff] %v253
    %502 = vst [vmem:[%s3 + $0x18] sm:$0xff] %v256
    %503 = vst [vmem:[%s3 + $0x20] sm:$0xff] %v261
    %504 = vst [vmem:[%s3 + $0x28] sm:$0xff] %v264
    %505 = vst [vmem:[%s3 + $0x30] sm:$0xff] %v269
    %506 = vst [vmem:[%s3 + $0x38] sm:$0xff] %v272
    %507 = vst [vmem:[%s3 + $0x40] sm:$0xff] %v277
    %508 = vst [vmem:[%s3 + $0x48] sm:$0xff] %v280
    %509 = vst [vmem:[%s3 + $0x50] sm:$0xff] %v285
    %510 = vst [vmem:[%s3 + $0x58] sm:$0xff] %v288
    %511 = vst [vmem:[%s3 + $0x60] sm:$0xff] %v293
    %512 = vst [vmem:[%s3 + $0x68] sm:$0xff] %v296
    %513 = vst [vmem:[%s3 + $0x70] sm:$0xff] %v301
    %514 = vst [vmem:[%s3 + $0x78] sm:$0xff] %v304
    %515 = vst [vmem:[%s3 + $0x80] sm:$0xff] %v309
    %516 = vst [vmem:[%s3 + $0x88] sm:$0xff] %v312
    %517 = vst [vmem:[%s3 + $0x90] sm:$0xff] %v317
    %518 = vst [vmem:[%s3 + $0x98] sm:$0xff] %v320
    %519 = vst [vmem:[%s3 + $0xa0] sm:$0xff] %v325
    %520 = vst [vmem:[%s3 + $0xa8] sm:$0xff] %v328
    %521 = vst [vmem:[%s3 + $0xb0] sm:$0xff] %v333
    %522 = vst [vmem:[%s3 + $0xb8] sm:$0xff] %v336
    %523 = vst [vmem:[%s3 + $0xc0] sm:$0xff] %v341
    %524 = vst [vmem:[%s3 + $0xc8] sm:$0xff] %v344
    %525 = vst [vmem:[%s3 + $0xd0] sm:$0xff] %v349
    %526 = vst [vmem:[%s3 + $0xd8] sm:$0xff] %v352
    %527 = vst [vmem:[%s3 + $0xe0] sm:$0xff] %v357
    %528 = vst [vmem:[%s3 + $0xe8] sm:$0xff] %v360
    %529 = vst [vmem:[%s3 + $0xf0] sm:$0xff] %v365
    %530 = vst [vmem:[%s3 + $0xf8] sm:$0xff] %v368
    %531 = vst [vmem:[%s3 + $0x100] sm:$0xff] %v373
    %532 = vst [vmem:[%s3 + $0x108] sm:$0xff] %v376
    %533 = vst [vmem:[%s3 + $0x110] sm:$0xff] %v381
    %534 = vst [vmem:[%s3 + $0x118] sm:$0xff] %v384
    %535 = vst [vmem:[%s3 + $0x120] sm:$0xff] %v389
    %536 = vst [vmem:[%s3 + $0x128] sm:$0xff] %v392
    %537 = vst [vmem:[%s3 + $0x130] sm:$0xff] %v397
    %538 = vst [vmem:[%s3 + $0x138] sm:$0xff] %v400
    %539 = vst [vmem:[%s3 + $0x140] sm:$0xff] %v405
    %540 = vst [vmem:[%s3 + $0x148] sm:$0xff] %v408
    %541 = vst [vmem:[%s3 + $0x150] sm:$0xff] %v413
    %542 = vst [vmem:[%s3 + $0x158] sm:$0xff] %v416
    %543 = vst [vmem:[%s3 + $0x160] sm:$0xff] %v421
    %544 = vst [vmem:[%s3 + $0x168] sm:$0xff] %v424
    %545 = vst [vmem:[%s3 + $0x170] sm:$0xff] %v429
    %546 = vst [vmem:[%s3 + $0x178] sm:$0xff] %v432
    %547 = vst [vmem:[%s3 + $0x180] sm:$0xff] %v437
    %548 = vst [vmem:[%s3 + $0x188] sm:$0xff] %v440
    %549 = vst [vmem:[%s3 + $0x190] sm:$0xff] %v445
    %550 = vst [vmem:[%s3 + $0x198] sm:$0xff] %v448
    %551 = vst [vmem:[%s3 + $0x1a0] sm:$0xff] %v453
    %552 = vst [vmem:[%s3 + $0x1a8] sm:$0xff] %v456
    %553 = vst [vmem:[%s3 + $0x1b0] sm:$0xff] %v461
    %554 = vst [vmem:[%s3 + $0x1b8] sm:$0xff] %v464
    %555 = vst [vmem:[%s3 + $0x1c0] sm:$0xff] %v469
    %556 = vst [vmem:[%s3 + $0x1c8] sm:$0xff] %v472
    %557 = vst [vmem:[%s3 + $0x1d0] sm:$0xff] %v477
    %558 = vst [vmem:[%s3 + $0x1d8] sm:$0xff] %v480
    %559 = vst [vmem:[%s3 + $0x1e0] sm:$0xff] %v485
    %560 = vst [vmem:[%s3 + $0x1e8] sm:$0xff] %v488
    %561 = vst [vmem:[%s3 + $0x1f0] sm:$0xff] %v493
    %562 = vst [vmem:[%s3 + $0x1f8] sm:$0xff] %v496
    // Predicated region
    $region22: #{model_forward.1} parent=1 // pred_check
      _
    $region23: #{model_forward.1} parent=1 // pred_check_branch
      %564 = sbr.rel (0) target = $region25
    $region24: #{model_forward.1} parent=1 // pred_region
      _
    $region25: #{model_forward.1} parent=1 // pred_fallthru
      _
    // Predicated region
    $region26: #{model_forward.1} parent=1 // pred_check
      _
    $region27: #{model_forward.1} parent=1 // pred_check_branch
      %566 = sbr.rel (0) target = $region29
    $region28: #{model_forward.1} parent=1 // pred_region
      _
    $region29: #{model_forward.1} parent=1 // pred_fallthru
      _
    %567 = vsyncpa [#allocation3], 1
    %568 = vsyncpa [#allocation5], 1

</llo_original>
